<compile_context>
chip_gen: v7x
topology: tpu7x:2x2x1
jax: 0.10.0
libtpu: 0.0.40
codegen_flags: <defaults>
</compile_context>

<pallas_src>
import math
from functools import partial

import jax
import jax.numpy as jnp
from jax.experimental import pallas as pl
from jax.experimental.pallas import tpu as pltpu


def _number_embedder_kernel(x_ref, w_ref, wx_ref, wsc_ref, b_ref, o_ref):
    x = x_ref[...]                                   # (TM, 1)
    freqs = x * w_ref[...]                           # (TM, D2); 2*pi folded into w
    sc = jnp.concatenate([jnp.sin(freqs), jnp.cos(freqs)], axis=-1)   # (TM, 2*D2)
    # x-column of the Linear + bias on the VPU (K=1 "matmul" is a broadcast).
    acc = x * wx_ref[...] + b_ref[...]               # (TM, F)
    # Single K=2*D2 MXU contraction for the sin|cos features.
    acc = acc + jnp.dot(sc, wsc_ref[...], preferred_element_type=jnp.float32)
    o_ref[...] = acc


def _round_up(n, m):
    return ((n + m - 1) // m) * m


@partial(jax.jit, static_argnames=("features",))
def number_embedder(x, weights, lin_w, lin_b, features):
    """x: any shape. weights: (dim//2,). lin_w: (features, dim+1) torch layout.
    lin_b: (features,). Returns (*x.shape, features), f32."""
    orig_shape = x.shape
    xf = x.reshape(-1).astype(jnp.float32)
    n = xf.shape[0]
    d2 = weights.shape[0]

    # Row tile: big tiles for pipelining at large N, minimal padding at tiny N.
    tm = 512 if n >= 512 else _round_up(max(n, 1), 8)
    n_pad = _round_up(n, tm)
    if n_pad != n:
        xf = jnp.pad(xf, (0, n_pad - n))

    x2 = xf[:, None]                                               # (Npad, 1)
    # Fold the 2*pi constant into the (1, D2) weights row (done once, jitted).
    w2 = (weights.astype(jnp.float32) * (2.0 * math.pi))[None, :]  # (1, D2)

    # torch Linear: out = [x, sin, cos] @ lin_w.T + lin_b
    wt = lin_w.astype(jnp.float32).T                               # (dim+1, F)
    wx = wt[0:1, :]                                                # (1, F)   x column
    wsc = wt[1:, :]                                                # (2*D2,F) [Wsin; Wcos]
    b2 = lin_b.astype(jnp.float32)[None, :]                        # (1, F)

    grid = (n_pad // tm,)
    out = pl.pallas_call(
        _number_embedder_kernel,
        out_shape=jax.ShapeDtypeStruct((n_pad, features), jnp.float32),
        grid=grid,
        in_specs=[
            pl.BlockSpec((tm, 1), lambda i: (i, 0)),              # x rows (tiled)
            pl.BlockSpec((1, d2), lambda i: (0, 0)),              # scaled weights (resident)
            pl.BlockSpec((1, features), lambda i: (0, 0)),        # Wx row (resident)
            pl.BlockSpec((2 * d2, features), lambda i: (0, 0)),   # Wsc (resident)
            pl.BlockSpec((1, features), lambda i: (0, 0)),        # bias (resident)
        ],
        out_specs=pl.BlockSpec((tm, features), lambda i: (i, 0)),
        compiler_params=pltpu.CompilerParams(
            dimension_semantics=("parallel",)),                   # v7x: shard rows on 2 TCs
    )(x2, w2, wx, wsc, b2)

    return out[:n].reshape(*orig_shape, features)


def _reference(x, weights, lin_w, lin_b, features):
    shape = x.shape
    xf = x.reshape(-1).astype(jnp.float32)[:, None]
    freqs = xf * weights[None, :] * (2.0 * math.pi)
    fouriered = jnp.concatenate([jnp.sin(freqs), jnp.cos(freqs)], axis=-1)
    fouriered = jnp.concatenate([xf, fouriered], axis=-1)
    out = fouriered @ lin_w.T + lin_b
    return out.reshape(*shape, features)


if __name__ == "__main__":
    features = 32
    dim = 256
    assert dim % 2 == 0

    key = jax.random.PRNGKey(0)
    k_x, k_w, k_lw, k_lb = jax.random.split(key, 4)

    # Deterministic params mimicking the module's __init__ shapes:
    #   weights ~ randn(dim//2); Linear(dim+1 -> features) with uniform init.
    weights = jax.random.normal(k_w, (dim // 2,), dtype=jnp.float32)
    bound = 1.0 / math.sqrt(dim + 1)
    lin_w = jax.random.uniform(k_lw, (features, dim + 1), jnp.float32, -bound, bound)
    lin_b = jax.random.uniform(k_lb, (features,), jnp.float32, -bound, bound)

    # Example "numbers" input, e.g. a (batch, seq) grid of timestep scalars.
    x = jax.random.uniform(k_x, (2, 4), jnp.float32, 0.0, 1.0)

    out = number_embedder(x, weights, lin_w, lin_b, features)
    out = jax.block_until_ready(out)

    ref = _reference(x, weights, lin_w, lin_b, features)
    assert out.shape == (2, 4, features), out.shape
    assert jnp.allclose(out, ref, atol=1e-4, rtol=1e-4), float(jnp.max(jnp.abs(out - ref)))

    print("KERNEL_OK")
</pallas_src>

<mosaic_0001>
module attributes {stable_mosaic.version = 11 : i64} {
  func.func @_number_embedder_kernel(%arg0: i32, %arg1: memref<8x1xf32, #tpu.memory_space<vmem>>, %arg2: memref<1x128xf32, #tpu.memory_space<vmem>>, %arg3: memref<1x32xf32, #tpu.memory_space<vmem>>, %arg4: memref<256x32xf32, #tpu.memory_space<vmem>>, %arg5: memref<1x32xf32, #tpu.memory_space<vmem>>, %arg6: memref<8x32xf32, #tpu.memory_space<vmem>>) attributes {dimension_semantics = [#tpu.dimension_semantics<parallel>], iteration_bounds = array<i64: 1>, scalar_prefetch = 0 : i64, scratch_operands = 0 : i64, tpu.core_type = #tpu.core_type<tc>, window_params = [{transform_indices = @transform_0, window_bounds = array<i64: 8, 1>}, {pipeline_mode = #tpu.pipeline_mode<synchronous>, transform_indices = @transform_1, window_bounds = array<i64: 1, 128>}, {pipeline_mode = #tpu.pipeline_mode<synchronous>, transform_indices = @transform_2, window_bounds = array<i64: 1, 32>}, {pipeline_mode = #tpu.pipeline_mode<synchronous>, transform_indices = @transform_3, window_bounds = array<i64: 256, 32>}, {pipeline_mode = #tpu.pipeline_mode<synchronous>, transform_indices = @transform_4, window_bounds = array<i64: 1, 32>}, {transform_indices = @transform_5, window_bounds = array<i64: 8, 32>}]} {
    %c0 = arith.constant 0 : index
    %c0_0 = arith.constant 0 : index
    %0 = vector.load %arg1[%c0, %c0_0] : memref<8x1xf32, #tpu.memory_space<vmem>>, vector<8x1xf32>
    %c0_1 = arith.constant 0 : index
    %c0_2 = arith.constant 0 : index
    %1 = vector.load %arg2[%c0_1, %c0_2] : memref<1x128xf32, #tpu.memory_space<vmem>>, vector<1x128xf32>
    %2 = vector.broadcast %0 : vector<8x1xf32> to vector<8x128xf32>
    %3 = vector.broadcast %1 : vector<1x128xf32> to vector<8x128xf32>
    %4 = arith.mulf %2, %3 : vector<8x128xf32>
    %5 = math.sin %4 : vector<8x128xf32>
    %6 = math.cos %4 : vector<8x128xf32>
    %7 = tpu.concatenate %5, %6 in 1 : vector<8x128xf32>, vector<8x128xf32> -> vector<8x256xf32>
    %c0_3 = arith.constant 0 : index
    %c0_4 = arith.constant 0 : index
    %8 = vector.load %arg3[%c0_3, %c0_4] : memref<1x32xf32, #tpu.memory_space<vmem>>, vector<1x32xf32>
    %9 = vector.broadcast %0 : vector<8x1xf32> to vector<8x32xf32>
    %10 = vector.broadcast %8 : vector<1x32xf32> to vector<8x32xf32>
    %11 = arith.mulf %9, %10 : vector<8x32xf32>
    %c0_5 = arith.constant 0 : index
    %c0_6 = arith.constant 0 : index
    %12 = vector.load %arg5[%c0_5, %c0_6] : memref<1x32xf32, #tpu.memory_space<vmem>>, vector<1x32xf32>
    %13 = vector.broadcast %12 : vector<1x32xf32> to vector<8x32xf32>
    %14 = arith.addf %11, %13 : vector<8x32xf32>
    %c0_7 = arith.constant 0 : index
    %c0_8 = arith.constant 0 : index
    %15 = vector.load %arg4[%c0_7, %c0_8] : memref<256x32xf32, #tpu.memory_space<vmem>>, vector<256x32xf32>
    %cst = arith.constant dense<0.000000e+00> : vector<8x32xf32>
    %16 = tpu.matmul %7, %15, %cst {dimension_numbers = #tpu.dot_dimension_numbers<[1], [0], [0], [1], [0, 0, 1, 1], [], []>} : vector<8x256xf32>, vector<256x32xf32>, vector<8x32xf32> -> vector<8x32xf32>
    %17 = arith.addf %14, %16 : vector<8x32xf32>
    %c0_9 = arith.constant 0 : index
    %c0_10 = arith.constant 0 : index
    %18 = vector.load %arg6[%c0_9, %c0_10] : memref<8x32xf32, #tpu.memory_space<vmem>>, vector<8x32xf32>
    tpu.vector_store %arg6[%c0_9, %c0_10], %17 {strides = array<i32>} : memref<8x32xf32, #tpu.memory_space<vmem>>, vector<8x32xf32>,
    return
  }
  func.func @transform_0(%arg0: i32) -> (i32, i32) {
    %c0_i32 = arith.constant 0 : i32
    %c0_i32_0 = arith.constant 0 : i32
    return %arg0, %c0_i32 : i32, i32
  }
  func.func @transform_1(%arg0: i32) -> (i32, i32) {
    %c0_i32 = arith.constant 0 : i32
    %c0_i32_0 = arith.constant 0 : i32
    %c0_i32_1 = arith.constant 0 : i32
    return %c0_i32, %c0_i32_0 : i32, i32
  }
  func.func @transform_2(%arg0: i32) -> (i32, i32) {
    %c0_i32 = arith.constant 0 : i32
    %c0_i32_0 = arith.constant 0 : i32
    %c0_i32_1 = arith.constant 0 : i32
    return %c0_i32, %c0_i32_0 : i32, i32
  }
  func.func @transform_3(%arg0: i32) -> (i32, i32) {
    %c0_i32 = arith.constant 0 : i32
    %c0_i32_0 = arith.constant 0 : i32
    %c0_i32_1 = arith.constant 0 : i32
    return %c0_i32, %c0_i32_0 : i32, i32
  }
  func.func @transform_4(%arg0: i32) -> (i32, i32) {
    %c0_i32 = arith.constant 0 : i32
    %c0_i32_0 = arith.constant 0 : i32
    %c0_i32_1 = arith.constant 0 : i32
    return %c0_i32, %c0_i32_0 : i32, i32
  }
  func.func @transform_5(%arg0: i32) -> (i32, i32) {
    %c0_i32 = arith.constant 0 : i32
    %c0_i32_0 = arith.constant 0 : i32
    return %arg0, %c0_i32 : i32, i32
  }
}

</mosaic_0001>

<llo_original>
// kernel: number_embedder.1
$region0: #{number_embedder.1}
  #allocation0 [shape = 'u32[]', space=smem, size = 0x4, offset = 0x4, fixed_abs, tag = 'smem constant byte address 0x4 - core index']
  #allocation1 [shape = 'u32[144,128]{1,0:T(1,128)}', space=vmem, size = 0x12000, scoped, tag = 'internal scratch']
  %s0 = inlined_call_operand.vmem [shape: f32[8,1], index: 0, kind: input, shape index: {}]
  %s1 = inlined_call_operand.vmem [shape: f32[1,128], index: 1, kind: input, shape index: {}]
  %s2 = inlined_call_operand.vmem [shape: f32[1,32], index: 2, kind: input, shape index: {}]
  %s3 = inlined_call_operand.vmem [shape: f32[256,32], index: 3, kind: input, shape index: {}]
  %s4 = inlined_call_operand.vmem [shape: f32[1,32], index: 4, kind: input, shape index: {}]
  %s5 = inlined_call_operand.hbm [shape: f32[8,32], index: 5, kind: output, shape index: {}]
  %s6 = sld [smem:[#allocation0]]
  $region30: #{number_embedder.1} parent=0
    _
  %s8 = ssub.s32 1, %s6
  %s9 = scalar_select 0, %s8, %s6
  $region1: #{number_embedder.1} parent=0
    #allocation2 [shape = 'u8[4096]{0}', space=vmem, size = 0x1000, scoped, tag = 'output window, operand 0, single buffered']
    #allocation3 [shape = 's32[1]{0}', space=sflag, size = 0x4, scoped, tag = 'scoped memory for number_embedder.1']
    %10 = vsyncpa [#allocation3], 0
    // Predicated region
    $region2: #{number_embedder.1} parent=1 // pred_check
      _
    $region3: #{number_embedder.1} parent=1 // pred_check_branch
      %12 = sbr.rel (0) target = $region5
    $region4: #{number_embedder.1} parent=1 // pred_region
      _
    $region5: #{number_embedder.1} parent=1 // pred_fallthru
      _
    // Predicated region
    $region6: #{number_embedder.1} parent=1 // pred_check
      _
    $region7: #{number_embedder.1} parent=1 // pred_check_branch
      %14 = sbr.rel (0) target = $region9
    $region8: #{number_embedder.1} parent=1 // pred_region
      _
    $region9: #{number_embedder.1} parent=1 // pred_fallthru
      _
    // Predicated region
    $region10: #{number_embedder.1} parent=1 // pred_check
      _
    $region11: #{number_embedder.1} parent=1 // pred_check_branch
      %16 = sbr.rel (0) target = $region13
    $region12: #{number_embedder.1} parent=1 // pred_region
      _
    $region13: #{number_embedder.1} parent=1 // pred_fallthru
      _
    // Predicated region
    $region14: #{number_embedder.1} parent=1 // pred_check
      _
    $region15: #{number_embedder.1} parent=1 // pred_check_branch
      %18 = sbr.rel (0) target = $region17
    $region16: #{number_embedder.1} parent=1 // pred_region
      _
    $region17: #{number_embedder.1} parent=1 // pred_fallthru
      _
    // Predicated region
    $region18: #{number_embedder.1} parent=1 // pred_check
      _
    $region19: #{number_embedder.1} parent=1 // pred_check_branch
      %20 = sbr.rel (0) target = $region21
    $region20: #{number_embedder.1} parent=1 // pred_region
      _
    $region21: #{number_embedder.1} parent=1 // pred_fallthru
      _
    %v21 = vld [vmem:[%s0] sm:$0xff]
    %v22 = vld [vmem:[%s1] sm:$0x1]
    %24 = vset.pattern.permute.xlu0 0
    %25 = vperm.xlu0 %24, %v21
    %v26 = vpop.permute.xlu0 %25
    %v29 = vlaneseq
    %v30 = vshrl.u32 %v29, 7
    %v31 = vsub.s32 0, %v30
    %v32 = vrot.slane %v22, %v31
    %v34 = vmul.f32 %v26, %v32
    %v35 = vand.u32 2147483647, %v34
    %vm36 = vcmp.le.f32.partialorder %v35, 0.7853982
    %vm37 = vcmp.lt.s32.totalorder %v34, 0
    %v38 = vand.u32 %v34, 2139095040
    %v39 = vshrl.u32 %v38, 23
    %v40 = vsub.s32 %v39, 127
    %v41 = vand.u32 2147483647, %v34
    %v42 = vand.u32 %v41, 8388607
    %v43 = vor.u32 %v42, 8388608
    %v44 = vsub.s32 0, %v43
    %v45 = vadd.s32 %v40, 1
    %vm46 = vcmp.gt.s32.totalorder %v45, 0
    %v47 = vsel %vm46, %v45, 0
    %v48 = vshrl.u32 %v47, 5
    %v49 = vand.u32 %v47, 31
    %v50 = vsub.s32 32, %v49
    %v51 = vshrl.u32 683565275, %v50
    %v52 = vshll.u32 683565275, %v49
    %v53 = vshrl.u32 2475754826, %v50
    %v54 = vor.u32 %v52, %v53
    %v55 = vshll.u32 2475754826, %v49
    %v56 = vshrl.u32 2131351028, %v50
    %v57 = vor.u32 %v55, %v56
    %v58 = vshll.u32 2131351028, %v49
    %v59 = vshrl.u32 2102212464, %v50
    %v60 = vor.u32 %v58, %v59
    %v61 = vshll.u32 2102212464, %v49
    %v62 = vshrl.u32 920167782, %v50
    %v63 = vor.u32 %v61, %v62
    %v64 = vshll.u32 920167782, %v49
    %v65 = vshrl.u32 1326507024, %v50
    %v66 = vor.u32 %v64, %v65
    %vm67 = vcmp.lt.s32.totalorder %v48, 1
    %vm68 = vcmp.lt.s32.totalorder %v48, 2
    %vm69 = vcmp.lt.s32.totalorder %v48, 3
    %vm70 = vcmp.lt.s32.totalorder %v48, 4
    %v71 = vsel %vm67, %v51, %v54
    %v72 = vsel %vm70, %v60, 2102212464
    %v73 = vsel %vm69, %v57, %v72
    %v74 = vsel %vm68, %v71, %v73
    %v75 = vsel %vm67, %v54, %v57
    %v76 = vsel %vm70, %v63, 920167782
    %v77 = vsel %vm69, %v60, %v76
    %v78 = vsel %vm68, %v75, %v77
    %v79 = vsel %vm67, %v57, %v60
    %v80 = vsel %vm70, %v66, 1326507024
    %v81 = vsel %vm69, %v63, %v80
    %v82 = vsel %vm68, %v79, %v81
    %v83 = vshll.u32 %v43, 8
    %v84 = vmul.u32.u64.compose %v83, %v82
    %v85 = vextract.low.u32 %v84
    %v86 = vextract.high.u32 %v84
    %v87 = vmul.u32.u64.compose %v83, %v78
    %v88 = vextract.low.u32 %v87
    %v89 = vextract.high.u32 %v87
    %v90 = vmul.u32 %v83, %v74
    %v91 = vadd.s32 %v86, %v88
    %vm92 = vc.u32 %v86, %v88
    %v93 = vadd.s32 %v89, 1
    %v94 = vsel %vm92, %v93, %v89
    %v95 = vadd.s32 %v90, %v94
    %v96 = vadd.s32 %v95, 536870912
    %v97 = vshrl.u32 %v96, 30
    %v98 = vshll.u32 %v97, 30
    %v99 = vsub.s32 %v95, %v98
    %vm100 = vcmp.lt.s32.totalorder %v99, 0
    %v101 = vsub.s32 0, %v99
    %v102 = vsel %vm100, %v101, %v99
    %v103 = vclz %v102
    %v104 = vsub.s32 %v103, 2
    %vm105 = vcmp.gt.s32.totalorder 0, %v104
    %v106 = vsel %vm105, 0, %v104
    %v107 = vsub.s32 32, %v106
    %v108 = vshll.u32 %v99, %v106
    %v109 = vshrl.u32 %v91, %v107
    %v110 = vor.u32 %v108, %v109
    %v111 = vsub.s32 4294967266, %v106
    %v112 = vadd.s32 %v111, 127
    %v113 = vshll.u32 %v112, 23
    %v114 = vor.u32 4788187, %v113
    %v115 = vand.u32 2147483647, %v114
    %v117 = vcvt.s32.f32 %v110
    %v118 = vmul.f32 %v117, %v115
    %v119 = vxor.u32 %v118, 2147483648
    %v120 = vsel %vm37, %v119, %v118
    %v121 = vsub.s32 4, %v97
    %v122 = vsel %vm37, %v121, %v97
    %v123 = vsel %vm36, %v34, %v120
    %v124 = vsel %vm36, 0, %v122
    %v125 = vcosq.f32.pop %v123
    %v126 = vsinq.f32.pop %v123
    %vm127 = vweird.f32 %v34
    %v128 = vadd.s32 %v124, 3
    %v129 = vand.u32 %v128, 3
    %vm130 = vcmp.lt.s32.totalorder %v129, 2
    %vm131 = vcmp.eq.s32.totalorder %v129, 0
    %v132 = vxor.u32 %v126, 2147483648
    %v133 = vsel %vm131, %v125, %v132
    %vm134 = vcmp.eq.s32.totalorder %v129, 2
    %v135 = vxor.u32 %v125, 2147483648
    %v136 = vsel %vm134, %v135, %v126
    %v137 = vsel %vm130, %v133, %v136
    %v138 = vsel %vm127, nan, %v137
    %v139 = vand.u32 2147483647, %v34
    %vm140 = vcmp.le.f32.partialorder %v139, 0.7853982
    %vm141 = vcmp.lt.s32.totalorder %v34, 0
    %v142 = vand.u32 %v34, 2139095040
    %v143 = vshrl.u32 %v142, 23
    %v144 = vsub.s32 %v143, 127
    %v145 = vand.u32 2147483647, %v34
    %v146 = vand.u32 %v145, 8388607
    %v147 = vor.u32 %v146, 8388608
    %v148 = vsub.s32 0, %v147
    %v149 = vadd.s32 %v144, 1
    %vm150 = vcmp.gt.s32.totalorder %v149, 0
    %v151 = vsel %vm150, %v149, 0
    %v152 = vshrl.u32 %v151, 5
    %v153 = vand.u32 %v151, 31
    %v154 = vsub.s32 32, %v153
    %v155 = vshrl.u32 683565275, %v154
    %v156 = vshll.u32 683565275, %v153
    %v157 = vshrl.u32 2475754826, %v154
    %v158 = vor.u32 %v156, %v157
    %v159 = vshll.u32 2475754826, %v153
    %v160 = vshrl.u32 2131351028, %v154
    %v161 = vor.u32 %v159, %v160
    %v162 = vshll.u32 2131351028, %v153
    %v163 = vshrl.u32 2102212464, %v154
    %v164 = vor.u32 %v162, %v163
    %v165 = vshll.u32 2102212464, %v153
    %v166 = vshrl.u32 920167782, %v154
    %v167 = vor.u32 %v165, %v166
    %v168 = vshll.u32 920167782, %v153
    %v169 = vshrl.u32 1326507024, %v154
    %v170 = vor.u32 %v168, %v169
    %vm171 = vcmp.lt.s32.totalorder %v152, 1
    %vm172 = vcmp.lt.s32.totalorder %v152, 2
    %vm173 = vcmp.lt.s32.totalorder %v152, 3
    %vm174 = vcmp.lt.s32.totalorder %v152, 4
    %v175 = vsel %vm171, %v155, %v158
    %v176 = vsel %vm174, %v164, 2102212464
    %v177 = vsel %vm173, %v161, %v176
    %v178 = vsel %vm172, %v175, %v177
    %v179 = vsel %vm171, %v158, %v161
    %v180 = vsel %vm174, %v167, 920167782
    %v181 = vsel %vm173, %v164, %v180
    %v182 = vsel %vm172, %v179, %v181
    %v183 = vsel %vm171, %v161, %v164
    %v184 = vsel %vm174, %v170, 1326507024
    %v185 = vsel %vm173, %v167, %v184
    %v186 = vsel %vm172, %v183, %v185
    %v187 = vshll.u32 %v147, 8
    %v188 = vmul.u32.u64.compose %v187, %v186
    %v189 = vextract.low.u32 %v188
    %v190 = vextract.high.u32 %v188
    %v191 = vmul.u32.u64.compose %v187, %v182
    %v192 = vextract.low.u32 %v191
    %v193 = vextract.high.u32 %v191
    %v194 = vmul.u32 %v187, %v178
    %v195 = vadd.s32 %v190, %v192
    %vm196 = vc.u32 %v190, %v192
    %v197 = vadd.s32 %v193, 1
    %v198 = vsel %vm196, %v197, %v193
    %v199 = vadd.s32 %v194, %v198
    %v200 = vadd.s32 %v199, 536870912
    %v201 = vshrl.u32 %v200, 30
    %v202 = vshll.u32 %v201, 30
    %v203 = vsub.s32 %v199, %v202
    %vm204 = vcmp.lt.s32.totalorder %v203, 0
    %v205 = vsub.s32 0, %v203
    %v206 = vsel %vm204, %v205, %v203
    %v207 = vclz %v206
    %v208 = vsub.s32 %v207, 2
    %vm209 = vcmp.gt.s32.totalorder 0, %v208
    %v210 = vsel %vm209, 0, %v208
    %v211 = vsub.s32 32, %v210
    %v212 = vshll.u32 %v203, %v210
    %v213 = vshrl.u32 %v195, %v211
    %v214 = vor.u32 %v212, %v213
    %v215 = vsub.s32 4294967266, %v210
    %v216 = vadd.s32 %v215, 127
    %v217 = vshll.u32 %v216, 23
    %v218 = vor.u32 4788187, %v217
    %v219 = vand.u32 2147483647, %v218
    %v221 = vcvt.s32.f32 %v214
    %v222 = vmul.f32 %v221, %v219
    %v223 = vxor.u32 %v222, 2147483648
    %v224 = vsel %vm141, %v223, %v222
    %v225 = vsub.s32 4, %v201
    %v226 = vsel %vm141, %v225, %v201
    %v227 = vsel %vm140, %v34, %v224
    %v228 = vsel %vm140, 0, %v226
    %v229 = vcosq.f32.pop %v227
    %v230 = vsinq.f32.pop %v227
    %vm231 = vweird.f32 %v34
    %v232 = vand.u32 %v228, 3
    %vm233 = vcmp.lt.s32.totalorder %v232, 2
    %vm234 = vcmp.eq.s32.totalorder %v232, 0
    %v235 = vxor.u32 %v230, 2147483648
    %v236 = vsel %vm234, %v229, %v235
    %vm237 = vcmp.eq.s32.totalorder %v232, 2
    %v238 = vxor.u32 %v229, 2147483648
    %v239 = vsel %vm237, %v238, %v230
    %v240 = vsel %vm233, %v236, %v239
    %v241 = vsel %vm231, nan, %v240
    %v242 = vld [vmem:[%s2] sm:$0x1]
    %v244 = vlaneseq
    %v245 = vshrl.u32 %v244, 7
    %v246 = vsub.s32 0, %v245
    %v247 = vrot.slane %v242, %v246
    %v249 = vmul.f32 %v26, %v247
    %v250 = vld [vmem:[%s4] sm:$0x1]
    %v252 = vlaneseq
    %v253 = vshrl.u32 %v252, 7
    %v254 = vsub.s32 0, %v253
    %v255 = vrot.slane %v250, %v254
    %v257 = vadd.f32 %v249, %v255
    %v258 = vld [vmem:[%s3] sm:$0xff]
    %v259 = vld [vmem:[%s3 + $0x8] sm:$0xff]
    %v260 = vld [vmem:[%s3 + $0x10] sm:$0xff]
    %v261 = vld [vmem:[%s3 + $0x18] sm:$0xff]
    %v262 = vld [vmem:[%s3 + $0x20] sm:$0xff]
    %v263 = vld [vmem:[%s3 + $0x28] sm:$0xff]
    %v264 = vld [vmem:[%s3 + $0x30] sm:$0xff]
    %v265 = vld [vmem:[%s3 + $0x38] sm:$0xff]
    %v266 = vld [vmem:[%s3 + $0x40] sm:$0xff]
    %v267 = vld [vmem:[%s3 + $0x48] sm:$0xff]
    %v268 = vld [vmem:[%s3 + $0x50] sm:$0xff]
    %v269 = vld [vmem:[%s3 + $0x58] sm:$0xff]
    %v270 = vld [vmem:[%s3 + $0x60] sm:$0xff]
    %v271 = vld [vmem:[%s3 + $0x68] sm:$0xff]
    %v272 = vld [vmem:[%s3 + $0x70] sm:$0xff]
    %v273 = vld [vmem:[%s3 + $0x78] sm:$0xff]
    %v274 = vld [vmem:[%s3 + $0x80] sm:$0xff]
    %v275 = vld [vmem:[%s3 + $0x88] sm:$0xff]
    %v276 = vld [vmem:[%s3 + $0x90] sm:$0xff]
    %v277 = vld [vmem:[%s3 + $0x98] sm:$0xff]
    %v278 = vld [vmem:[%s3 + $0xa0] sm:$0xff]
    %v279 = vld [vmem:[%s3 + $0xa8] sm:$0xff]
    %v280 = vld [vmem:[%s3 + $0xb0] sm:$0xff]
    %v281 = vld [vmem:[%s3 + $0xb8] sm:$0xff]
    %v282 = vld [vmem:[%s3 + $0xc0] sm:$0xff]
    %v283 = vld [vmem:[%s3 + $0xc8] sm:$0xff]
    %v284 = vld [vmem:[%s3 + $0xd0] sm:$0xff]
    %v285 = vld [vmem:[%s3 + $0xd8] sm:$0xff]
    %v286 = vld [vmem:[%s3 + $0xe0] sm:$0xff]
    %v287 = vld [vmem:[%s3 + $0xe8] sm:$0xff]
    %v288 = vld [vmem:[%s3 + $0xf0] sm:$0xff]
    %v289 = vld [vmem:[%s3 + $0xf8] sm:$0xff]
    %290 = vmatprep.subr.mxu0 0.0
    %291 = vmatpush1.msra.mxu0 %v258
    %292 = vmatprep.subr.mxu0 0.0
    %293 = vmatpush1.msra.mxu0 %v259
    %294 = vmatprep.subr.mxu0 0.0
    %295 = vmatpush1.msra.mxu0 %v260
    %296 = vmatprep.subr.mxu0 0.0
    %297 = vmatpush1.msra.mxu0 %v261
    %298 = vmatprep.subr.mxu0 0.0
    %299 = vmatpush1.msra.mxu0 %v262
    %300 = vmatprep.subr.mxu0 0.0
    %301 = vmatpush1.msra.mxu0 %v263
    %302 = vmatprep.subr.mxu0 0.0
    %303 = vmatpush1.msra.mxu0 %v264
    %304 = vmatprep.subr.mxu0 0.0
    %305 = vmatpush1.msra.mxu0 %v265
    %306 = vmatprep.subr.mxu0 0.0
    %307 = vmatpush1.msra.mxu0 %v266
    %308 = vmatprep.subr.mxu0 0.0
    %309 = vmatpush1.msra.mxu0 %v267
    %310 = vmatprep.subr.mxu0 0.0
    %311 = vmatpush1.msra.mxu0 %v268
    %312 = vmatprep.subr.mxu0 0.0
    %313 = vmatpush1.msra.mxu0 %v269
    %314 = vmatprep.subr.mxu0 0.0
    %315 = vmatpush1.msra.mxu0 %v270
    %316 = vmatprep.subr.mxu0 0.0
    %317 = vmatpush1.msra.mxu0 %v271
    %318 = vmatprep.subr.mxu0 0.0
    %319 = vmatpush1.msra.mxu0 %v272
    %320 = vmatprep.subr.mxu0 0.0
    %321 = vmatpush1.msra.mxu0 %v273
    %322 = vmatprep.subr.mxu0 0.0
    %323 = vmatpush1.msra.mxu0 %v274
    %324 = vmatprep.subr.mxu0 0.0
    %325 = vmatpush1.msra.mxu0 %v275
    %326 = vmatprep.subr.mxu0 0.0
    %327 = vmatpush1.msra.mxu0 %v276
    %328 = vmatprep.subr.mxu0 0.0
    %329 = vmatpush1.msra.mxu0 %v277
    %330 = vmatprep.subr.mxu0 0.0
    %331 = vmatpush1.msra.mxu0 %v278
    %332 = vmatprep.subr.mxu0 0.0
    %333 = vmatpush1.msra.mxu0 %v279
    %334 = vmatprep.subr.mxu0 0.0
    %335 = vmatpush1.msra.mxu0 %v280
    %336 = vmatprep.subr.mxu0 0.0
    %337 = vmatpush1.msra.mxu0 %v281
    %338 = vmatprep.subr.mxu0 0.0
    %339 = vmatpush1.msra.mxu0 %v282
    %340 = vmatprep.subr.mxu0 0.0
    %341 = vmatpush1.msra.mxu0 %v283
    %342 = vmatprep.subr.mxu0 0.0
    %343 = vmatpush1.msra.mxu0 %v284
    %344 = vmatprep.subr.mxu0 0.0
    %345 = vmatpush1.msra.mxu0 %v285
    %346 = vmatprep.subr.mxu0 0.0
    %347 = vmatpush1.msra.mxu0 %v286
    %348 = vmatprep.subr.mxu0 0.0
    %349 = vmatpush1.msra.mxu0 %v287
    %350 = vmatprep.subr.mxu0 0.0
    %351 = vmatpush1.msra.mxu0 %v288
    %352 = vmatprep.subr.mxu0 0.0
    %353 = vmatpush1.msra.mxu0 %v289
    %354 = vmatprep.mubr.f32.mxu0 %v241
    %355 = vmatmul.mubr.f32.gmra.mrb[0].mxu0 %v138
    %v356 = vpop.f32.mrb[0].mxu0
    %v357 = vadd.f32 0.0, %v356
    %v358 = vpop.f32.mrb[0].mxu0
    %359 = vdwg.mxu0
    %v360 = vadd.f32 %v257, %v357
    %vm361 = vcmask 261120
    %362 = vst.msk [vmem:[#allocation2] sm:$0xff] %vm361, %v360
    // Predicated region
    $region22: #{number_embedder.1} parent=1 // pred_check
      _
    $region23: #{number_embedder.1} parent=1 // pred_check_branch
      %364 = sbr.rel (0) target = $region25
    $region24: #{number_embedder.1} parent=1 // pred_region
      %s366 = ssub.s32 128, 128
      %367 = vsyncadd [#allocation3], %s366
      %s369 = sshll.u32 [#allocation2], 4
      %s370 = int_to_ptr.vmem [resolvable:$true] %s369
      %372 = dma.vmem_to_hbm [thread:$0]  %s370, 128, %s5, [#allocation3]
    $region25: #{number_embedder.1} parent=1 // pred_fallthru
      _
    // Predicated region
    $region26: #{number_embedder.1} parent=1 // pred_check
      _
    $region27: #{number_embedder.1} parent=1 // pred_check_branch
      %374 = sbr.rel (0) target = $region29
    $region28: #{number_embedder.1} parent=1 // pred_region
      %375 = dma.done [#allocation3], 128
    $region29: #{number_embedder.1} parent=1 // pred_fallthru
      _
    %376 = vsyncpa [#allocation3], 1

</llo_original>
